<compile_context>
chip_gen: v7x
topology: tpu7x:2x2x1
jax: 0.10.0
libtpu: 0.0.40
codegen_flags: <defaults>
</compile_context>

<pallas_src>
import math
import functools

import jax
import jax.numpy as jnp
from jax import lax
from jax.experimental import pallas as pl
from jax.experimental.pallas import tpu as pltpu


_MASK_VALUE = -1e30
_VMEM_LIMIT = 32 * 1024 * 1024     # explicit scoped-VMEM budget (safe on v5e/v6e/v7x)


# ---------------------------------------------------------------------------
# tiling helpers
# ---------------------------------------------------------------------------
def _sublane_align(dtype):
    """8 for f32, 16 for bf16, 32 for int8/fp8 (sub-32-bit packs along sublanes)."""
    return max(8, 32 // jnp.dtype(dtype).itemsize)


def _tile_and_pad(dim, target, align):
    """Pick a tile for `dim`; returns (tile, padded_dim).

    - dim <= target: one full-dim block (always legal under the (8,128) rule).
    - else prefer an aligned divisor of dim in [target/2, target].
    - else pad dim up to a multiple of an aligned `target` tile (never fall back
      to a single monolithic block).
    """
    if dim <= target:
        return dim, dim
    target = max(align, (target // align) * align)
    lo = max(align, (target // 2 // align) * align)
    t = target
    while t >= lo:
        if dim % t == 0:
            return t, dim
        t -= align
    padded = ((dim + target - 1) // target) * target
    return target, padded


def _pad_axis(x, axis, new_size):
    pad = new_size - x.shape[axis]
    if pad == 0:
        return x
    widths = [(0, 0)] * x.ndim
    widths[axis] = (0, pad)
    return jnp.pad(x, widths)


def _pick_head_group(num_heads, head_dim):
    """Smallest divisor G of H with G*D a multiple of 128 (lane-dense output
    block).  Falls back to all heads (block == full E, also legal)."""
    for g in range(1, num_heads + 1):
        if num_heads % g == 0 and (g * head_dim) % 128 == 0:
            return g
    return num_heads


# ---------------------------------------------------------------------------
# Kernel 1: tiled matmul + bias  (used for in_proj and out_proj)
# ---------------------------------------------------------------------------
def _linear_kernel(x_ref, w_ref, b_ref, o_ref, acc_ref):
    # x: (tm, tk), w: (tn, tk), b: (1, tn)  ->  o = x @ w.T + b (accumulated over k)
    k = pl.program_id(2)

    @pl.when(k == 0)
    def _():
        acc_ref[...] = jnp.zeros_like(acc_ref)

    # (1,1) contraction: MXU consumes the weight in its native (Nout, K) layout.
    acc_ref[...] += lax.dot_general(
        x_ref[...], w_ref[...],
        dimension_numbers=(((1,), (1,)), ((), ())),
        preferred_element_type=jnp.float32,
    )

    @pl.when(k == pl.num_programs(2) - 1)
    def _():
        o_ref[...] = (acc_ref[...] + b_ref[...].astype(jnp.float32)).astype(o_ref.dtype)


def linear(x, w, b, *, tm=512, tn=256, tk=512):
    """y = x @ w.T + b with a tiled (M, Nout, K) grid and f32 VMEM accumulator."""
    M, K = x.shape
    n_out = w.shape[0]
    sub = _sublane_align(x.dtype)

    tm, Mp = _tile_and_pad(M, tm, sub)
    tn, Np = _tile_and_pad(n_out, tn, 128)
    tk, Kp = _tile_and_pad(K, tk, 128)

    # Zero-padding K / Nout / M is exact (extra contributions are 0, extra
    # rows/cols are sliced off); keeps the software pipeline alive for any shape.
    xp = _pad_axis(_pad_axis(x, 0, Mp), 1, Kp)
    wp = _pad_axis(_pad_axis(w, 0, Np), 1, Kp)
    bp = _pad_axis(b, 0, Np).reshape(1, Np)

    out = pl.pallas_call(
        _linear_kernel,
        out_shape=jax.ShapeDtypeStruct((Mp, Np), x.dtype),
        grid_spec=pltpu.PrefetchScalarGridSpec(
            num_scalar_prefetch=0,
            grid=(Mp // tm, Np // tn, Kp // tk),
            in_specs=[
                pl.BlockSpec((tm, tk), lambda i, j, k: (i, k)),
                pl.BlockSpec((tn, tk), lambda i, j, k: (j, k)),
                pl.BlockSpec((1, tn), lambda i, j, k: (0, j)),
            ],
            out_specs=pl.BlockSpec((tm, tn), lambda i, j, k: (i, j)),
            scratch_shapes=[pltpu.VMEM((tm, tn), jnp.float32)],
        ),
        compiler_params=pltpu.CompilerParams(
            dimension_semantics=("parallel", "parallel", "arbitrary"),
            vmem_limit_bytes=_VMEM_LIMIT),
    )(xp, wp, bp)
    if (Mp, Np) != (M, n_out):
        out = out[:M, :n_out]
    return out


# ---------------------------------------------------------------------------
# Kernel 2: flash-style scaled-dot-product attention
#   grid = (batch, head-group, L_q blocks, L_k blocks), online softmax over L_k.
#   Views: q (G, tq, D), k/v (G, tk, D), output block (tq, G*D) (lane-dense).
# ---------------------------------------------------------------------------
def _flash_attn_kernel(q_ref, k_ref, v_ref, o_ref, m_scr, l_scr, acc_scr,
                       *, scale, seq_len, masked):
    ki = pl.program_id(3)

    @pl.when(ki == 0)
    def _():
        m_scr[...] = jnp.full(m_scr.shape, _MASK_VALUE, dtype=m_scr.dtype)
        l_scr[...] = jnp.zeros_like(l_scr)
        acc_scr[...] = jnp.zeros_like(acc_scr)

    q = q_ref[...] * scale              # fold 1/sqrt(D) into Q (G*tq*D mults)
    k = k_ref[...]
    v = v_ref[...]

    # (G, tq, tk) scores: heads are a leading batch dim of one batched matmul,
    # f32 accumulation, native-dtype MXU inputs.
    s = jnp.einsum("gqd,gkd->gqk", q, k, preferred_element_type=jnp.float32)

    if masked:                           # static flag: only traced when L was padded
        tk = k_ref.shape[1]
        key_idx = ki * tk + lax.broadcasted_iota(jnp.int32, (1, 1, tk), 2)
        s = jnp.where(key_idx < seq_len, s, _MASK_VALUE)

    m_prev = m_scr[...]
    m_new = jnp.maximum(m_prev, jnp.max(s, axis=-1, keepdims=True))
    alpha = jnp.exp(m_prev - m_new)
    p = jnp.exp(s - m_new)
    l_scr[...] = alpha * l_scr[...] + jnp.sum(p, axis=-1, keepdims=True)
    acc_scr[...] = alpha * acc_scr[...] + jnp.einsum(
        "gqk,gkd->gqd", p.astype(v.dtype), v, preferred_element_type=jnp.float32)
    m_scr[...] = m_new

    @pl.when(ki == pl.num_programs(3) - 1)
    def _():
        # Normalize the (G, tq, D) accumulator (L*D mults, not L*L) and write it
        # head-by-head into the lane-dense (tq, G*D) output block.  This loop only
        # runs at finalize; each head's live range is a single (tq, D) slab.
        inv = pl.reciprocal(l_scr[...])   # TODO(synk): approx=True once tolerance is relaxed
        num_g, _, head_dim = acc_scr.shape
        for g in range(num_g):
            o_ref[:, g * head_dim:(g + 1) * head_dim] = (
                acc_scr[g] * inv[g]).astype(o_ref.dtype)


def multihead_self_attention(x, w_in, b_in, w_out, b_out, num_heads,
                             *, block_q=128, block_k=128):
    """x: (L, N, E) seq-first.  Returns (L, N, E)."""
    L, N, E = x.shape
    H = num_heads
    D = E // H
    G = _pick_head_group(H, D)

    # --- packed input projection (tiled Pallas matmul) ---
    qkv = linear(x.reshape(L * N, E), w_in, b_in)             # (L*N, 3E)

    # One XLA relayout to a head-major (3, N, H, L, D) view so the flash kernel's
    # blocks are plain (G, tile, D) slabs (no in-kernel strided head slicing).
    # TODO(synk): fold this transpose into the in-proj kernel's output BlockSpec.
    qkv_t = jnp.transpose(qkv.reshape(L, N, 3, H, D), (2, 1, 3, 0, 4))

    sub = _sublane_align(x.dtype)
    tq, L_pad = _tile_and_pad(L, block_q, sub)
    tk = tq
    if L_pad != L:
        qkv_t = _pad_axis(qkv_t, 3, L_pad)                    # padded keys masked in-kernel

    scale = 1.0 / math.sqrt(D)
    kernel = functools.partial(_flash_attn_kernel, scale=scale, seq_len=L,
                               masked=(L_pad != L))

    q_spec = pl.BlockSpec((pl.Squeezed(), pl.Squeezed(), G, tq, D),
                          lambda n, hg, qi, ki: (0, n, hg, qi, 0))
    k_spec = pl.BlockSpec((pl.Squeezed(), pl.Squeezed(), G, tk, D),
                          lambda n, hg, qi, ki: (1, n, hg, ki, 0),
                          pipeline_mode=pl.Buffered(buffer_count=3))
    v_spec = pl.BlockSpec((pl.Squeezed(), pl.Squeezed(), G, tk, D),
                          lambda n, hg, qi, ki: (2, n, hg, ki, 0),
                          pipeline_mode=pl.Buffered(buffer_count=3))
    # Lane-dense output: (tq, G*D) blocks of (N, L_pad, E); G*D % 128 == 0 or == E.
    o_spec = pl.BlockSpec((pl.Squeezed(), tq, G * D),
                          lambda n, hg, qi, ki: (n, qi, hg))

    attn = pl.pallas_call(
        kernel,
        out_shape=jax.ShapeDtypeStruct((N, L_pad, E), x.dtype),
        grid_spec=pltpu.PrefetchScalarGridSpec(
            num_scalar_prefetch=0,
            grid=(N, H // G, L_pad // tq, L_pad // tk),
            in_specs=[q_spec, k_spec, v_spec],
            out_specs=o_spec,
            scratch_shapes=[
                pltpu.VMEM((G, tq, 1), jnp.float32),          # running max m
                pltpu.VMEM((G, tq, 1), jnp.float32),          # running denom l
                pltpu.VMEM((G, tq, D), jnp.float32),          # output accumulator
            ],
        ),
        compiler_params=pltpu.CompilerParams(
            dimension_semantics=("parallel", "parallel", "parallel", "arbitrary"),
            vmem_limit_bytes=_VMEM_LIMIT),
    )(qkv_t, qkv_t, qkv_t)

    if L_pad != L:
        attn = attn[:, :L, :]

    # --- output projection (per-token, so N-major token order is fine) ---
    # TODO(synk): fuse out_proj into the attention finalize to save one HBM round trip.
    out = linear(attn.reshape(N * L, E), w_out, b_out)         # (N*L, E)
    return jnp.transpose(out.reshape(N, L, E), (1, 0, 2))      # back to (L, N, E)


# ---------------------------------------------------------------------------
# Pure-JAX reference (mirrors torch.nn.functional.multi_head_attention_forward)
# ---------------------------------------------------------------------------
def mha_reference(x, w_in, b_in, w_out, b_out, num_heads):
    L, N, E = x.shape
    D = E // num_heads
    qkv = jnp.einsum("lne,fe->lnf", x, w_in) + b_in
    q, k, v = jnp.split(qkv, 3, axis=-1)

    def split_heads(t):  # (L, N, E) -> (N, H, L, D)
        return jnp.transpose(t.reshape(L, N, num_heads, D), (1, 2, 0, 3))

    q, k, v = split_heads(q), split_heads(k), split_heads(v)
    s = jnp.einsum("nhld,nhmd->nhlm", q, k) / math.sqrt(D)
    p = jax.nn.softmax(s, axis=-1)
    o = jnp.einsum("nhlm,nhmd->nhld", p, v)
    o = jnp.transpose(o, (2, 0, 1, 3)).reshape(L, N, E)
    return jnp.einsum("lne,fe->lnf", o, w_out) + b_out


def _run_case(key, L, N, E, H, tol):
    kx, kwi, kbi, kwo, kbo = jax.random.split(key, 5)
    x = jax.random.normal(kx, (L, N, E), dtype=jnp.float32)
    # nn.MultiheadAttention parameter shapes:
    w_in = jax.random.normal(kwi, (3 * E, E), dtype=jnp.float32) * 0.1   # in_proj_weight
    b_in = jax.random.normal(kbi, (3 * E,), dtype=jnp.float32) * 0.1     # in_proj_bias
    w_out = jax.random.normal(kwo, (E, E), dtype=jnp.float32) * 0.1      # out_proj.weight
    b_out = jax.random.normal(kbo, (E,), dtype=jnp.float32) * 0.1        # out_proj.bias

    out = multihead_self_attention(x, w_in, b_in, w_out, b_out, H)
    out = jax.block_until_ready(out)

    ref = mha_reference(x, w_in, b_in, w_out, b_out, H)
    assert out.shape == (L, N, E)
    assert jnp.allclose(out, ref, atol=tol, rtol=tol), \
        f"mismatch vs reference (L={L}, N={N}, E={E}, H={H})"


if __name__ == "__main__":
    key = jax.random.PRNGKey(0)
    k1, k2 = jax.random.split(key)
    # Small shapes consistent with the module: seq L=8, batch N=2, E=32, H=4 (D=8).
    _run_case(k1, L=8, N=2, E=32, H=4, tol=1e-4)
    # Slightly larger case exercising flash L_q/L_k tiling, key-mask padding
    # (L=200 -> 256) and the multi-tile linear grid (3E=768 -> three 256 tiles).
    _run_case(k2, L=200, N=2, E=256, H=4, tol=2e-3)
    print("KERNEL_OK")
</pallas_src>

<mosaic_0001>
module attributes {stable_mosaic.version = 11 : i64} {
  func.func @_linear_kernel(%arg0: i32, %arg1: i32, %arg2: i32, %arg3: memref<16x32xf32, #tpu.memory_space<vmem>>, %arg4: memref<96x32xf32, #tpu.memory_space<vmem>>, %arg5: memref<1x96xf32, #tpu.memory_space<vmem>>, %arg6: memref<16x96xf32, #tpu.memory_space<vmem>>, %arg7: memref<16x96xf32, #tpu.memory_space<vmem>>) attributes {dimension_semantics = [#tpu.dimension_semantics<parallel>, #tpu.dimension_semantics<parallel>, #tpu.dimension_semantics<arbitrary>], iteration_bounds = array<i64: 1, 1, 1>, scalar_prefetch = 0 : i64, scratch_operands = 1 : i64, tpu.core_type = #tpu.core_type<tc>, window_params = [{transform_indices = @transform_0, window_bounds = array<i64: 16, 32>}, {transform_indices = @transform_1, window_bounds = array<i64: 96, 32>}, {transform_indices = @transform_2, window_bounds = array<i64: 1, 96>}, {transform_indices = @transform_3, window_bounds = array<i64: 16, 96>}]} {
    %c0_i32 = arith.constant 0 : i32
    %0 = arith.cmpi eq, %arg2, %c0_i32 : i32
    %1 = arith.extui %0 : i1 to i32
    %c0_i32_0 = arith.constant 0 : i32
    %2 = arith.cmpi ne, %1, %c0_i32_0 : i32
    scf.if %2 {
      %cst_10 = arith.constant 0.000000e+00 : f32
      %12 = vector.broadcast %cst_10 : f32 to vector<16x96xf32>
      %c0_11 = arith.constant 0 : index
      %c0_12 = arith.constant 0 : index
      %13 = vector.load %arg7[%c0_11, %c0_12] : memref<16x96xf32, #tpu.memory_space<vmem>>, vector<16x96xf32>
      tpu.vector_store %arg7[%c0_11, %c0_12], %12 {strides = array<i32>} : memref<16x96xf32, #tpu.memory_space<vmem>>, vector<16x96xf32>,
    } else {
    }
    %c0 = arith.constant 0 : index
    %c0_1 = arith.constant 0 : index
    %3 = vector.load %arg7[%c0, %c0_1] : memref<16x96xf32, #tpu.memory_space<vmem>>, vector<16x96xf32>
    %c0_2 = arith.constant 0 : index
    %c0_3 = arith.constant 0 : index
    %4 = vector.load %arg3[%c0_2, %c0_3] : memref<16x32xf32, #tpu.memory_space<vmem>>, vector<16x32xf32>
    %c0_4 = arith.constant 0 : index
    %c0_5 = arith.constant 0 : index
    %5 = vector.load %arg4[%c0_4, %c0_5] : memref<96x32xf32, #tpu.memory_space<vmem>>, vector<96x32xf32>
    %cst = arith.constant dense<0.000000e+00> : vector<16x96xf32>
    %6 = tpu.matmul %4, %5, %cst {dimension_numbers = #tpu.dot_dimension_numbers<[1], [1], [0], [0], [0, 0, 1, 0], [], []>} : vector<16x32xf32>, vector<96x32xf32>, vector<16x96xf32> -> vector<16x96xf32>
    %7 = arith.addf %3, %6 : vector<16x96xf32>
    %c0_6 = arith.constant 0 : index
    %c0_7 = arith.constant 0 : index
    %8 = vector.load %arg7[%c0_6, %c0_7] : memref<16x96xf32, #tpu.memory_space<vmem>>, vector<16x96xf32>
    tpu.vector_store %arg7[%c0_6, %c0_7], %7 {strides = array<i32>} : memref<16x96xf32, #tpu.memory_space<vmem>>, vector<16x96xf32>,
    %c0_i32_8 = arith.constant 0 : i32
    %9 = arith.cmpi eq, %arg2, %c0_i32_8 : i32
    %10 = arith.extui %9 : i1 to i32
    %c0_i32_9 = arith.constant 0 : i32
    %11 = arith.cmpi ne, %10, %c0_i32_9 : i32
    scf.if %11 {
      %c0_10 = arith.constant 0 : index
      %c0_11 = arith.constant 0 : index
      %12 = vector.load %arg7[%c0_10, %c0_11] : memref<16x96xf32, #tpu.memory_space<vmem>>, vector<16x96xf32>
      %c0_12 = arith.constant 0 : index
      %c0_13 = arith.constant 0 : index
      %13 = vector.load %arg5[%c0_12, %c0_13] : memref<1x96xf32, #tpu.memory_space<vmem>>, vector<1x96xf32>
      %14 = vector.broadcast %13 : vector<1x96xf32> to vector<16x96xf32>
      %15 = arith.addf %12, %14 : vector<16x96xf32>
      %c0_14 = arith.constant 0 : index
      %c0_15 = arith.constant 0 : index
      %16 = vector.load %arg6[%c0_14, %c0_15] : memref<16x96xf32, #tpu.memory_space<vmem>>, vector<16x96xf32>
      tpu.vector_store %arg6[%c0_14, %c0_15], %15 {strides = array<i32>} : memref<16x96xf32, #tpu.memory_space<vmem>>, vector<16x96xf32>,
    } else {
    }
    return
  }
  func.func @transform_0(%arg0: i32, %arg1: i32, %arg2: i32) -> (i32, i32) {
    %c0_i32 = arith.constant 0 : i32
    return %arg0, %arg2 : i32, i32
  }
  func.func @transform_1(%arg0: i32, %arg1: i32, %arg2: i32) -> (i32, i32) {
    %c0_i32 = arith.constant 0 : i32
    return %arg1, %arg2 : i32, i32
  }
  func.func @transform_2(%arg0: i32, %arg1: i32, %arg2: i32) -> (i32, i32) {
    %c0_i32 = arith.constant 0 : i32
    %c0_i32_0 = arith.constant 0 : i32
    return %c0_i32, %arg1 : i32, i32
  }
  func.func @transform_3(%arg0: i32, %arg1: i32, %arg2: i32) -> (i32, i32) {
    %c0_i32 = arith.constant 0 : i32
    return %arg0, %arg1 : i32, i32
  }
}

</mosaic_0001>

<llo_original>
// kernel: tpu_custom_call.1
$region0: #{tpu_custom_call.1}
  #allocation0 [shape = 'u32[]', space=smem, size = 0x4, offset = 0x4, fixed_abs, tag = 'smem constant byte address 0x4 - core index']
  #allocation1 [shape = 'u32[144,128]{1,0:T(1,128)}', space=vmem, size = 0x12000, scoped, tag = 'internal scratch']
  #allocation2 [shape = 'f32[16,96]{1,0:T(8,128)}', space=vmem, size = 0x2000, scoped, tag = 'scratch operand']
  %s0 = inlined_call_operand.vmem [shape: f32[16,32], index: 0, kind: input, shape index: {}]
  %s1 = inlined_call_operand.vmem [shape: f32[96,32], index: 1, kind: input, shape index: {}]
  %s2 = inlined_call_operand.vmem [shape: f32[1,96], index: 2, kind: input, shape index: {}]
  %s3 = inlined_call_operand.hbm [shape: f32[16,96], index: 3, kind: output, shape index: {}]
  %s4 = sld [smem:[#allocation0]]
  $region30: #{tpu_custom_call.1} parent=0
    _
  %s6 = ssub.s32 1, %s4
  %s7 = scalar_select 0, %s6, %s4
  $region1: #{tpu_custom_call.1} parent=0
    #allocation3 [shape = 'u8[8192]{0}', space=vmem, size = 0x2000, scoped, tag = 'output window, operand 0, single buffered']
    #allocation4 [shape = 's32[1]{0}', space=sflag, size = 0x4, scoped, tag = 'scoped memory for tpu_custom_call.1']
    %8 = vsyncpa [#allocation4], 0
    // Predicated region
    $region2: #{tpu_custom_call.1} parent=1 // pred_check
      _
    $region3: #{tpu_custom_call.1} parent=1 // pred_check_branch
      %10 = sbr.rel (0) target = $region5
    $region4: #{tpu_custom_call.1} parent=1 // pred_region
      _
    $region5: #{tpu_custom_call.1} parent=1 // pred_fallthru
      _
    // Predicated region
    $region6: #{tpu_custom_call.1} parent=1 // pred_check
      _
    $region7: #{tpu_custom_call.1} parent=1 // pred_check_branch
      %12 = sbr.rel (0) target = $region9
    $region8: #{tpu_custom_call.1} parent=1 // pred_region
      _
    $region9: #{tpu_custom_call.1} parent=1 // pred_fallthru
      _
    // Predicated region
    $region10: #{tpu_custom_call.1} parent=1 // pred_check
      _
    $region11: #{tpu_custom_call.1} parent=1 // pred_check_branch
      %14 = sbr.rel (0) target = $region13
    $region12: #{tpu_custom_call.1} parent=1 // pred_region
      _
    $region13: #{tpu_custom_call.1} parent=1 // pred_fallthru
      _
    %p15 = scmp.eq.s32.totalorder 0, 0
    // Predicated region
    $region14: #{tpu_custom_call.1} parent=1 // pred_check
      %p16 = pneg %p15
    $region15: #{tpu_custom_call.1} parent=1 // pred_check_branch
      %18 = sbr.rel (%p16) target = $region17
    $region16: #{tpu_custom_call.1} parent=1 // pred_region
      %vm19 = vcmask 785408
      %20 = vst.msk [vmem:[#allocation2] sm:$0xff] %vm19, 0.0
      %21 = vst.msk [vmem:[#allocation2 + $0x8] sm:$0xff] %vm19, 0.0
    $region17: #{tpu_custom_call.1} parent=1 // pred_fallthru
      _
    %v22 = vld [vmem:[#allocation2] sm:$0xff]
    %v23 = vld [vmem:[#allocation2 + $0x8] sm:$0xff]
    %v24 = vld [vmem:[%s0] sm:$0xff]
    %v25 = vld [vmem:[%s0 + $0x8] sm:$0xff]
    %v26 = vld [vmem:[%s1] sm:$0xff]
    %v27 = vld [vmem:[%s1 + $0x8] sm:$0xff]
    %v28 = vld [vmem:[%s1 + $0x10] sm:$0xff]
    %v29 = vld [vmem:[%s1 + $0x18] sm:$0xff]
    %v30 = vld [vmem:[%s1 + $0x20] sm:$0xff]
    %v31 = vld [vmem:[%s1 + $0x28] sm:$0xff]
    %v32 = vld [vmem:[%s1 + $0x30] sm:$0xff]
    %v33 = vld [vmem:[%s1 + $0x38] sm:$0xff]
    %v34 = vld [vmem:[%s1 + $0x40] sm:$0xff]
    %v35 = vld [vmem:[%s1 + $0x48] sm:$0xff]
    %v36 = vld [vmem:[%s1 + $0x50] sm:$0xff]
    %v37 = vld [vmem:[%s1 + $0x58] sm:$0xff]
    %vm38 = vcmask 261120
    %v40 = vsel %vm38, %v24, 0
    %v43 = vsel %vm38, %v25, 0
    %v46 = vsel %vm38, %v26, 0
    %v49 = vsel %vm38, %v27, 0
    %v52 = vsel %vm38, %v28, 0
    %v55 = vsel %vm38, %v29, 0
    %v58 = vsel %vm38, %v30, 0
    %v61 = vsel %vm38, %v31, 0
    %v64 = vsel %vm38, %v32, 0
    %v67 = vsel %vm38, %v33, 0
    %v70 = vsel %vm38, %v34, 0
    %v73 = vsel %vm38, %v35, 0
    %v76 = vsel %vm38, %v36, 0
    %v79 = vsel %vm38, %v37, 0
    %81 = vmatprep.subr.mxu0 0.0
    %82 = vmatpush1.xpose.msra.mxu0 %v46
    %83 = vmatprep.subr.mxu0 0.0
    %84 = vmatpush1.xpose.msra.mxu0 %v49
    %85 = vmatprep.subr.mxu0 0.0
    %86 = vmatpush1.xpose.msra.mxu0 %v52
    %87 = vmatprep.subr.mxu0 0.0
    %88 = vmatpush1.xpose.msra.mxu0 %v55
    %89 = vmatprep.subr.mxu0 0.0
    %90 = vmatpush1.xpose.msra.mxu0 %v58
    %91 = vmatprep.subr.mxu0 0.0
    %92 = vmatpush1.xpose.msra.mxu0 %v61
    %93 = vmatprep.subr.mxu0 0.0
    %94 = vmatpush1.xpose.msra.mxu0 %v64
    %95 = vmatprep.subr.mxu0 0.0
    %96 = vmatpush1.xpose.msra.mxu0 %v67
    %97 = vmatprep.subr.mxu0 0.0
    %98 = vmatpush1.xpose.msra.mxu0 %v70
    %99 = vmatprep.subr.mxu0 0.0
    %100 = vmatpush1.xpose.msra.mxu0 %v73
    %101 = vmatprep.subr.mxu0 0.0
    %102 = vmatpush1.xpose.msra.mxu0 %v76
    %103 = vmatprep.subr.mxu0 0.0
    %104 = vmatpush1.xpose.msra.mxu0 %v79
    %105 = vmatprep.subr.mxu0 0.0
    %106 = vmatpush1.xpose.msra.mxu0 0.0
    %107 = vmatprep.subr.mxu0 0.0
    %108 = vmatpush1.xpose.msra.mxu0 0.0
    %109 = vmatprep.subr.mxu0 0.0
    %110 = vmatpush1.xpose.msra.mxu0 0.0
    %111 = vmatprep.subr.mxu0 0.0
    %112 = vmatpush1.xpose.msra.mxu0 0.0
    %113 = vmatprep.subr.mxu0 0.0
    %114 = vmatpush1.xpose.msra.mxu0 0.0
    %115 = vmatprep.subr.mxu0 0.0
    %116 = vmatpush1.xpose.msra.mxu0 0.0
    %117 = vmatprep.subr.mxu0 0.0
    %118 = vmatpush1.xpose.msra.mxu0 0.0
    %119 = vmatprep.subr.mxu0 0.0
    %120 = vmatpush1.xpose.msra.mxu0 0.0
    %121 = vmatprep.subr.mxu0 0.0
    %122 = vmatpush1.xpose.msra.mxu0 0.0
    %123 = vmatprep.subr.mxu0 0.0
    %124 = vmatpush1.xpose.msra.mxu0 0.0
    %125 = vmatprep.subr.mxu0 0.0
    %126 = vmatpush1.xpose.msra.mxu0 0.0
    %127 = vmatprep.subr.mxu0 0.0
    %128 = vmatpush1.xpose.msra.mxu0 0.0
    %129 = vmatprep.subr.mxu0 0.0
    %130 = vmatpush1.xpose.msra.mxu0 0.0
    %131 = vmatprep.subr.mxu0 0.0
    %132 = vmatpush1.xpose.msra.mxu0 0.0
    %133 = vmatprep.subr.mxu0 0.0
    %134 = vmatpush1.xpose.msra.mxu0 0.0
    %135 = vmatprep.subr.mxu0 0.0
    %136 = vmatpush1.xpose.msra.mxu0 0.0
    %137 = vmatprep.subr.mxu0 0.0
    %138 = vmatpush1.xpose.msra.mxu0 0.0
    %139 = vmatprep.subr.mxu0 0.0
    %140 = vmatpush1.xpose.msra.mxu0 0.0
    %141 = vmatprep.subr.mxu0 0.0
    %142 = vmatpush1.xpose.msra.mxu0 0.0
    %143 = vmatprep.subr.mxu0 0.0
    %144 = vmatpush1.xpose.msra.mxu0 0.0
    %145 = vmatprep.mubr.f32.mxu0 0.0
    %146 = vmatmul.mubr.f32.gmra.mrb[0].mxu0 %v40
    %v147 = vpop.f32.mrb[0].mxu0
    %v148 = vadd.f32 0.0, %v147
    %v149 = vpop.f32.mrb[0].mxu0
    %150 = vmatprep.mubr.f32.mxu0 0.0
    %151 = vmatmul.mubr.f32.gmra.mrb[0].mxu0 %v43
    %v152 = vpop.f32.mrb[0].mxu0
    %v153 = vadd.f32 0.0, %v152
    %v154 = vpop.f32.mrb[0].mxu0
    %155 = vdwg.mxu0
    %v156 = vadd.f32 %v22, %v148
    %v157 = vadd.f32 %v23, %v153
    %vm158 = vcmask 785408
    %159 = vst.msk [vmem:[#allocation2] sm:$0xff] %vm158, %v156
    %160 = vst.msk [vmem:[#allocation2 + $0x8] sm:$0xff] %vm158, %v157
    // Predicated region
    $region18: #{tpu_custom_call.1} parent=1 // pred_check
      %p161 = pneg %p15
    $region19: #{tpu_custom_call.1} parent=1 // pred_check_branch
      %163 = sbr.rel (%p161) target = $region21
    $region20: #{tpu_custom_call.1} parent=1 // pred_region
      %v164 = vld [vmem:[#allocation2] sm:$0xff]
      %v165 = vld [vmem:[#allocation2 + $0x8] sm:$0xff]
      %v166 = vld [vmem:[%s2] sm:$0x1]
      %v168 = vlaneseq
      %v169 = vshrl.u32 %v168, 7
      %v170 = vsub.s32 0, %v169
      %v171 = vrot.slane %v166, %v170
      %v173 = vadd.f32 %v164, %v171
      %v174 = vadd.f32 %v165, %v171
      %175 = vst.msk [vmem:[#allocation3] sm:$0xff] %vm158, %v173
      %176 = vst.msk [vmem:[#allocation3 + $0x8] sm:$0xff] %vm158, %v174
    $region21: #{tpu_custom_call.1} parent=1 // pred_fallthru
      _
    // Predicated region
    $region22: #{tpu_custom_call.1} parent=1 // pred_check
      _
    $region23: #{tpu_custom_call.1} parent=1 // pred_check_branch
      %178 = sbr.rel (0) target = $region25
    $region24: #{tpu_custom_call.1} parent=1 // pred_region
      %s180 = ssub.s32 256, 256
      %181 = vsyncadd [#allocation4], %s180
      %s182 = sshll.u32 [#allocation3], 4
      %s183 = int_to_ptr.vmem [resolvable:$true] %s182
      %188 = dma.vmem_to_hbm [thread:$0]  %s183, 256, %s3, [#allocation4], 128, 128, 8
    $region25: #{tpu_custom_call.1} parent=1 // pred_fallthru
      _
    // Predicated region
    $region26: #{tpu_custom_call.1} parent=1 // pred_check
      _
    $region27: #{tpu_custom_call.1} parent=1 // pred_check_branch
      %190 = sbr.rel (0) target = $region29
    $region28: #{tpu_custom_call.1} parent=1 // pred_region
      %191 = dma.done [#allocation4], 256
    $region29: #{tpu_custom_call.1} parent=1 // pred_fallthru
      _
    %192 = vsyncpa [#allocation4], 1

</llo_original>
